<compile_context>
chip_gen: v7x
topology: tpu7x:2x2x1
jax: 0.10.0
libtpu: 0.0.40
codegen_flags: <defaults>
</compile_context>

<pallas_src>
import jax
import jax.numpy as jnp
from jax.experimental import pallas as pl
from jax.experimental.pallas import tpu as pltpu


def _make_cep_kernel(has_weights, batch_size, tile_rows, needs_row_mask):
    """Builds the per-tile kernel. Static specialization on weights / padding."""

    def kernel(q_ref, tgt_ref, *rest):
        if has_weights:
            w_ref, o_ref = rest
        else:
            w_ref = None
            (o_ref,) = rest

        q = q_ref[...].astype(jnp.float32)          # (TB, A)
        tgt = tgt_ref[...]                          # (TB, 1) int32
        tb, na = q.shape

        # gather: target_q[b] = q[b, tgt[b]]   (one-hot mask + lane reduce -> XLU)
        cols = jax.lax.broadcasted_iota(jnp.int32, (tb, na), 1)
        is_target = cols == tgt                                           # (TB, A)
        target_q = jnp.sum(jnp.where(is_target, q, 0.0), axis=1, keepdims=True)

        # -log(cum_p(target_q, q)) == softplus(q - target_q)  (numerically stable)
        x = q - target_q
        neg_log_p = jnp.maximum(x, 0.0) + jnp.log(1.0 + jnp.exp(-jnp.abs(x)))

        # scatter_: zero the weight at the target action
        if has_weights:
            w_eff = jnp.where(is_target, 0.0, w_ref[...].astype(jnp.float32))
        else:
            w_eff = jnp.where(is_target, 0.0, 1.0)

        # mask padded batch rows (only emitted when B was padded up to the grid)
        if needs_row_mask:
            rows = jax.lax.broadcasted_iota(jnp.int32, (tb, na), 0)
            valid = (pl.program_id(0) * tile_rows + rows) < batch_size
            w_eff = jnp.where(valid, w_eff, 0.0)

        partial = jnp.sum(w_eff * neg_log_p)
        # Full lane-aligned (1, 8, 128) block store of the tile's partial loss.
        o_ref[...] = jnp.broadcast_to(partial, o_ref.shape).astype(o_ref.dtype)

    return kernel


def cep_loss(pred_q_vals, target_action, weights=None):
    """JAX/Pallas CEP loss.

    pred_q_vals: (B, A) float (streamed in native dtype, e.g. bf16 or f32)
    target_action: (B,) int, values in [0, A)
    weights: optional (B, A) float
    Returns a float32 scalar.
    """
    B, A = pred_q_vals.shape
    has_weights = weights is not None

    # Batch tile: multiple of 8 sublanes; sized so 2 inputs x 2 pipeline buffers
    # stay far below even v7x's 32 MiB scoped-VMEM default (and v5e's 16 MiB).
    itemsize = jnp.dtype(pred_q_vals.dtype).itemsize
    tb = max(8, min(2048, (2 * 1024 * 1024) // max(1, A * itemsize)))
    tb = min((tb // 8) * 8, pl.cdiv(B, 8) * 8)
    num_tiles = pl.cdiv(B, tb)
    b_pad = num_tiles * tb
    needs_row_mask = b_pad != B

    q = pred_q_vals
    tgt = target_action.astype(jnp.int32).reshape(B, 1)
    if b_pad != B:
        q = jnp.pad(q, ((0, b_pad - B), (0, 0)))
        tgt = jnp.pad(tgt, ((0, b_pad - B), (0, 0)))

    inputs = [q, tgt]
    in_specs = [
        pl.BlockSpec((tb, A), lambda i: (i, 0)),      # pred_q_vals tile
        pl.BlockSpec((tb, 1), lambda i: (i, 0)),      # target_action tile
    ]
    if has_weights:
        w = weights
        if b_pad != B:
            w = jnp.pad(w, ((0, b_pad - B), (0, 0)))
        inputs.append(w)
        in_specs.append(pl.BlockSpec((tb, A), lambda i: (i, 0)))

    # NOTE: for tiny A (<< 128) a further win is packing 128//A batch rows per
    # vreg row for full lane utilization; skipped here since it requires an
    # extra HBM relayout pass of the input.

    kernel = _make_cep_kernel(has_weights, B, tb, needs_row_mask)

    in_bytes = sum(int(x.size) * jnp.dtype(x.dtype).itemsize for x in inputs)
    out_bytes = num_tiles * 8 * 128 * 4
    cost = pl.CostEstimate(
        flops=8 * b_pad * A,
        transcendentals=2 * b_pad * A,     # exp + log per element
        bytes_accessed=in_bytes + out_bytes,
    )

    partials = pl.pallas_call(
        kernel,
        out_shape=jax.ShapeDtypeStruct((num_tiles, 8, 128), jnp.float32),
        grid=(num_tiles,),
        in_specs=in_specs,
        out_specs=pl.BlockSpec((1, 8, 128), lambda i: (i, 0, 0)),
        compiler_params=pltpu.CompilerParams(
            dimension_semantics=("parallel",),
        ),
        cost_estimate=cost,
    )(*inputs)

    return jnp.sum(partials[:, 0, 0])


if __name__ == "__main__":
    key = jax.random.PRNGKey(0)
    k1, k2, k3 = jax.random.split(key, 3)

    B, A = 8, 16  # small: batch=8, num_actions=16
    pred_q_vals = jax.random.normal(k1, (B, A), dtype=jnp.float32)
    target_action = jax.random.randint(k2, (B,), 0, A, dtype=jnp.int32)
    weights = jax.random.uniform(k3, (B, A), dtype=jnp.float32)

    # Pure-JAX reference of the original torch math (direct exp/div/log form).
    def reference(q_vals, tgt, w=None):
        w = jnp.ones_like(q_vals) if w is None else w
        tq = jnp.take_along_axis(q_vals, tgt[:, None], axis=1)            # (B, 1)
        w = w * (1.0 - jax.nn.one_hot(tgt, q_vals.shape[1], dtype=q_vals.dtype))
        p = jnp.exp(tq) / (jnp.exp(tq) + jnp.exp(q_vals))
        return -jnp.sum(w * jnp.log(p))

    loss_default = cep_loss(pred_q_vals, target_action)             # weights=None path
    loss_weighted = cep_loss(pred_q_vals, target_action, weights)   # explicit-weights path
    jax.block_until_ready((loss_default, loss_weighted))

    ref_default = reference(pred_q_vals, target_action)
    ref_weighted = reference(pred_q_vals, target_action, weights)

    assert jnp.allclose(loss_default, ref_default, rtol=1e-5, atol=1e-4), (
        loss_default, ref_default)
    assert jnp.allclose(loss_weighted, ref_weighted, rtol=1e-5, atol=1e-4), (
        loss_weighted, ref_weighted)

    print("KERNEL_OK")
</pallas_src>

<mosaic_0001>
module attributes {stable_mosaic.version = 11 : i64} {
  func.func @kernel(%arg0: i32, %arg1: memref<8x16xf32, #tpu.memory_space<vmem>>, %arg2: memref<8x1xi32, #tpu.memory_space<vmem>>, %arg3: memref<1x8x128xf32, #tpu.memory_space<vmem>>) attributes {dimension_semantics = [#tpu.dimension_semantics<parallel>], iteration_bounds = array<i64: 1>, scalar_prefetch = 0 : i64, scratch_operands = 0 : i64, tpu.core_type = #tpu.core_type<tc>, window_params = [{transform_indices = @transform_0, window_bounds = array<i64: 8, 16>}, {transform_indices = @transform_1, window_bounds = array<i64: 8, 1>}, {transform_indices = @transform_2, window_bounds = array<i64: 1, 8, 128>}]} {
    %c0 = arith.constant 0 : index
    %c0_0 = arith.constant 0 : index
    %0 = vector.load %arg1[%c0, %c0_0] : memref<8x16xf32, #tpu.memory_space<vmem>>, vector<8x16xf32>
    %c0_1 = arith.constant 0 : index
    %c0_2 = arith.constant 0 : index
    %1 = vector.load %arg2[%c0_1, %c0_2] : memref<8x1xi32, #tpu.memory_space<vmem>>, vector<8x1xi32>
    %2 = tpu.iota {dimensions = array<i32: 1>} : vector<8x16xi32>
    %3 = vector.broadcast %1 : vector<8x1xi32> to vector<8x16xi32>
    %4 = arith.cmpi eq, %2, %3 : vector<8x16xi32>
    %cst = arith.constant 0.000000e+00 : f32
    %5 = vector.broadcast %cst : f32 to vector<8x16xf32>
    %6 = arith.select %4, %0, %5 : vector<8x16xi1>, vector<8x16xf32>
    %cst_3 = arith.constant dense<0.000000e+00> : vector<8xf32>
    %7 = vector.multi_reduction <add>, %6, %cst_3 [1] : vector<8x16xf32> to vector<8xf32>
    %8 = vector.shape_cast %7 : vector<8xf32> to vector<8x1xf32>
    %9 = vector.broadcast %8 : vector<8x1xf32> to vector<8x16xf32>
    %10 = arith.subf %0, %9 : vector<8x16xf32>
    %cst_4 = arith.constant 0.000000e+00 : f32
    %11 = vector.broadcast %cst_4 : f32 to vector<8x16xf32>
    %12 = arith.maximumf %10, %11 : vector<8x16xf32>
    %13 = math.absf %10 : vector<8x16xf32>
    %cst_5 = arith.constant 0.000000e+00 : f32
    %14 = vector.broadcast %cst_5 : f32 to vector<8x16xf32>
    %15 = arith.subf %14, %13 : vector<8x16xf32>
    %16 = math.exp %15 : vector<8x16xf32>
    %cst_6 = arith.constant 1.000000e+00 : f32
    %17 = vector.broadcast %cst_6 : f32 to vector<8x16xf32>
    %18 = arith.addf %17, %16 : vector<8x16xf32>
    %19 = math.log %18 : vector<8x16xf32>
    %20 = arith.addf %12, %19 : vector<8x16xf32>
    %cst_7 = arith.constant 0.000000e+00 : f32
    %cst_8 = arith.constant 1.000000e+00 : f32
    %21 = vector.broadcast %cst_7 : f32 to vector<8x16xf32>
    %22 = vector.broadcast %cst_8 : f32 to vector<8x16xf32>
    %23 = arith.select %4, %21, %22 : vector<8x16xi1>, vector<8x16xf32>
    %24 = arith.mulf %23, %20 : vector<8x16xf32>
    %25 = vector.shape_cast %24 : vector<8x16xf32> to vector<1x8x16xf32>
    %cst_9 = arith.constant dense<0.000000e+00> : vector<1xf32>
    %26 = vector.multi_reduction <add>, %25, %cst_9 [1, 2] : vector<1x8x16xf32> to vector<1xf32>
    %27 = vector.shape_cast %26 : vector<1xf32> to vector<1x1x1xf32>
    %28 = vector.extract %27[0, 0, 0] : f32 from vector<1x1x1xf32>
    %29 = vector.broadcast %28 : f32 to vector<1x8x128xf32>
    %c0_10 = arith.constant 0 : index
    %c0_11 = arith.constant 0 : index
    %c0_12 = arith.constant 0 : index
    %30 = vector.load %arg3[%c0_10, %c0_11, %c0_12] : memref<1x8x128xf32, #tpu.memory_space<vmem>>, vector<1x8x128xf32>
    tpu.vector_store %arg3[%c0_10, %c0_11, %c0_12], %29 {strides = array<i32>} : memref<1x8x128xf32, #tpu.memory_space<vmem>>, vector<1x8x128xf32>,
    return
  }
  func.func @transform_0(%arg0: i32) -> (i32, i32) {
    %c0_i32 = arith.constant 0 : i32
    %c0_i32_0 = arith.constant 0 : i32
    return %arg0, %c0_i32 : i32, i32
  }
  func.func @transform_1(%arg0: i32) -> (i32, i32) {
    %c0_i32 = arith.constant 0 : i32
    %c0_i32_0 = arith.constant 0 : i32
    return %arg0, %c0_i32 : i32, i32
  }
  func.func @transform_2(%arg0: i32) -> (i32, i32, i32) {
    %c0_i32 = arith.constant 0 : i32
    %c0_i32_0 = arith.constant 0 : i32
    %c0_i32_1 = arith.constant 0 : i32
    return %arg0, %c0_i32, %c0_i32_0 : i32, i32, i32
  }
}

</mosaic_0001>

<llo_original>
// kernel: tpu_custom_call.1
$region0: #{tpu_custom_call.1}
  #allocation0 [shape = 'u32[]', space=smem, size = 0x4, offset = 0x4, fixed_abs, tag = 'smem constant byte address 0x4 - core index']
  #allocation1 [shape = 'u32[144,128]{1,0:T(1,128)}', space=vmem, size = 0x12000, scoped, tag = 'internal scratch']
  %s0 = inlined_call_operand.vmem [shape: f32[8,16], index: 0, kind: input, shape index: {}]
  %s1 = inlined_call_operand.vmem [shape: s32[8,1], index: 1, kind: input, shape index: {}]
  %s2 = inlined_call_operand.hbm [shape: f32[1,8,128], index: 2, kind: output, shape index: {}]
  %s3 = sld [smem:[#allocation0]]
  $region18: #{tpu_custom_call.1} parent=0
    _
  %s5 = ssub.s32 1, %s3
  %s6 = scalar_select 0, %s5, %s3
  $region1: #{tpu_custom_call.1} parent=0
    #allocation2 [shape = 'u8[4096]{0}', space=vmem, size = 0x1000, scoped, tag = 'output window, operand 0, single buffered']
    #allocation3 [shape = 's32[1]{0}', space=sflag, size = 0x4, scoped, tag = 'scoped memory for tpu_custom_call.1']
    %7 = vsyncpa [#allocation3], 0
    // Predicated region
    $region2: #{tpu_custom_call.1} parent=1 // pred_check
      _
    $region3: #{tpu_custom_call.1} parent=1 // pred_check_branch
      %9 = sbr.rel (0) target = $region5
    $region4: #{tpu_custom_call.1} parent=1 // pred_region
      _
    $region5: #{tpu_custom_call.1} parent=1 // pred_fallthru
      _
    // Predicated region
    $region6: #{tpu_custom_call.1} parent=1 // pred_check
      _
    $region7: #{tpu_custom_call.1} parent=1 // pred_check_branch
      %11 = sbr.rel (0) target = $region9
    $region8: #{tpu_custom_call.1} parent=1 // pred_region
      _
    $region9: #{tpu_custom_call.1} parent=1 // pred_fallthru
      _
    %v12 = vld [vmem:[%s0] sm:$0xff]
    %v13 = vld [vmem:[%s1] sm:$0xff]
    %v14 = vlaneseq
    %v15 = vand.u32 %v14, 127
    %16 = vset.pattern.permute.xlu0 0
    %17 = vperm.xlu0 %16, %v13
    %v18 = vpop.permute.xlu0 %17
    %vm19 = vcmp.eq.s32.totalorder %v15, %v18
    %v20 = vsel %vm19, %v12, 0.0
    %vm21 = vcmask 130048
    %v22 = vsel %vm21, %v20, 0.0
    %23 = vadd.xlane.f32.xlu0 %v22
    %v24 = vpop.xlane.xlu0 %23
    %v25 = vsub.f32 %v12, %v24
    %v26 = vmax.f32 %v25, 0.0
    %v27 = vand.u32 2147483647, %v25
    %v28 = vsub.f32 0.0, %v27
    %v29 = vmul.f32 %v28, 1.442695
    %v30 = vpow.pop %v29
    %v31 = vadd.f32 %v30, 1.0
    %v32 = vlog2.pop %v31
    %v33 = vmul.f32 %v32, 0.6931472
    %v34 = vadd.f32 %v26, %v33
    %v35 = vsel %vm19, 0.0, 1.0
    %v36 = vmul.f32 %v35, %v34
    %v37 = vsel %vm21, %v36, 0.0
    %38 = vadd.xlane.f32.xlu0 %v37
    %v39 = vpop.xlane.xlu0 %38
    %v40 = vrot.slane %v39, 4
    %v41 = vadd.f32 %v39, %v40
    %v42 = vrot.slane %v41, 2
    %v43 = vadd.f32 %v41, %v42
    %v44 = vrot.slane %v43, 1
    %v45 = vadd.f32 %v43, %v44
    %s46 = vtos %v45
    %v47 = vstv %s46
    %48 = vst [vmem:[#allocation2] sm:$0xff] %v47
    // Predicated region
    $region10: #{tpu_custom_call.1} parent=1 // pred_check
      _
    $region11: #{tpu_custom_call.1} parent=1 // pred_check_branch
      %50 = sbr.rel (0) target = $region13
    $region12: #{tpu_custom_call.1} parent=1 // pred_region
      %s52 = ssub.s32 128, 128
      %53 = vsyncadd [#allocation3], %s52
      %s55 = sshll.u32 [#allocation2], 4
      %s56 = int_to_ptr.vmem [resolvable:$true] %s55
      %58 = dma.vmem_to_hbm [thread:$0]  %s56, 128, %s2, [#allocation3]
    $region13: #{tpu_custom_call.1} parent=1 // pred_fallthru
      _
    // Predicated region
    $region14: #{tpu_custom_call.1} parent=1 // pred_check
      _
    $region15: #{tpu_custom_call.1} parent=1 // pred_check_branch
      %60 = sbr.rel (0) target = $region17
    $region16: #{tpu_custom_call.1} parent=1 // pred_region
      %61 = dma.done [#allocation3], 128
    $region17: #{tpu_custom_call.1} parent=1 // pred_fallthru
      _
    %62 = vsyncpa [#allocation3], 1

</llo_original>
